<compile_context>
chip_gen: v7x
topology: tpu7x:2x2x1
jax: 0.10.0
libtpu: 0.0.40
codegen_flags: <defaults>
</compile_context>

<pallas_src>
import functools
import math

import jax
import jax.numpy as jnp
import numpy as np
from jax.experimental import pallas as pl
from jax.experimental.pallas import tpu as pltpu


def _round_up(x, m):
    return (x + m - 1) // m * m


# ----------------------------------------------------------------------------
# Static geometry (mirrors RV2BEV.__init__ buffer exactly).  numpy: this is
# one-time init work, never in the per-call path.
# ----------------------------------------------------------------------------
def build_grid(rv_size, bev_size, sensor_h=1.73, max_range=50.0,
               fov_phi=(-math.pi, math.pi),
               fov_theta=(-25 * math.pi / 180, 3 * math.pi / 180),
               range_xy=(-50.0, 50.0, -50.0, 50.0)):
    H_r, W_r = rv_size
    H_b, W_b = bev_size
    xmin, xmax, ymin, ymax = range_xy

    ii, jj = np.meshgrid(np.arange(H_b, dtype=np.float32),
                         np.arange(W_b, dtype=np.float32), indexing="ij")
    x = xmin + jj / (W_b - 1) * (xmax - xmin)
    y = ymax - ii / (H_b - 1) * (ymax - ymin)
    phi = np.arctan2(y, x)
    dist_xy = np.maximum(np.sqrt(x ** 2 + y ** 2), 0.001)
    theta = np.arctan2(-np.full_like(dist_xy, sensor_h), dist_xy)

    col = (phi - fov_phi[0]) / (fov_phi[1] - fov_phi[0]) * (W_r - 1)
    row = (fov_theta[1] - theta) / (fov_theta[1] - fov_theta[0]) * (H_r - 1)
    mask = (dist_xy > max_range) | (theta < fov_theta[0]) | (theta > fov_theta[1])
    col = np.where(mask, -2.0, col)
    row = np.where(mask, -2.0, row)

    grid_x = 2.0 * col / (W_r - 1) - 1.0          # (H_b, W_b), normalized [-1, 1]
    grid_y = 2.0 * row / (H_r - 1) - 1.0
    return grid_x.astype(np.float32), grid_y.astype(np.float32)


# ----------------------------------------------------------------------------
# One-time (cached) precompute: padded bf16 W_T, tile sizes and per-P-tile
# Q-band offsets for the band-restricted reduction.
# ----------------------------------------------------------------------------
@functools.lru_cache(maxsize=None)
def _precompute(rv_size, bev_size, tile_p, tile_q, sensor_h, max_range,
                fov_phi, fov_theta, range_xy):
    H_r, W_r = rv_size
    H_b, W_b = bev_size
    P = H_b * W_b
    Q = H_r * W_r

    gx, gy = build_grid(rv_size, bev_size, sensor_h, max_range, fov_phi,
                        fov_theta, range_xy)
    # Un-normalize (align_corners=True).
    x = (gx.reshape(-1) + 1.0) * 0.5 * (W_r - 1)
    y = (gy.reshape(-1) + 1.0) * 0.5 * (H_r - 1)
    x0f = np.floor(x)
    y0f = np.floor(y)
    wx1 = x - x0f
    wx0 = 1.0 - wx1
    wy1 = y - y0f
    wy0 = 1.0 - wy1
    x0 = x0f.astype(np.int64)
    y0 = y0f.astype(np.int64)
    x1 = x0 + 1
    y1 = y0 + 1

    # MXU / lane-friendly tiles and padding (multiples of 128 in both dims;
    # v5e's 128x128 and v6e/v7x's 256x256 MXU are both satisfied by 512).
    TP = min(tile_p, _round_up(P, 128))
    TQ = min(tile_q, _round_up(Q, 128))
    P_pad = _round_up(P, TP)
    Q_pad = _round_up(Q, TQ)
    num_p = P_pad // TP
    # v7x megacore: prefer an even number of P tiles so both TensorCores get
    # work along the "parallel" axis.
    if num_p > 1 and num_p % 2 == 1 and TP % 256 == 0:
        TP //= 2
        num_p = P_pad // TP
    num_q = Q_pad // TQ

    # Dense (pre-padded) sampling matrix: bilinear taps, padding_mode='zeros'.
    w_pad = np.zeros((Q_pad, P_pad), dtype=np.float32)
    cols = np.arange(P, dtype=np.int64)
    for xi, yi, w in ((x0, y0, wx0 * wy0), (x1, y0, wx1 * wy0),
                      (x0, y1, wx0 * wy1), (x1, y1, wx1 * wy1)):
        valid = (xi >= 0) & (xi < W_r) & (yi >= 0) & (yi < H_r)
        idx = np.where(valid, yi * W_r + xi, 0)
        np.add.at(w_pad, (idx, cols), np.where(valid, w, 0.0).astype(np.float32))

    # Band analysis: first/last non-zero Q block per P tile -> only that band
    # is streamed by the kernel.  Blocks inside the band with zero weights
    # contribute exactly 0, so correctness is unaffected.
    nz = np.abs(w_pad).reshape(num_q, TQ, num_p, TP).max(axis=(1, 3)) > 0.0
    has = nz.any(axis=0)                            # (num_p,)
    first = nz.argmax(axis=0)
    last = num_q - 1 - nz[::-1].argmax(axis=0)
    band = np.where(has, last - first + 1, 1)
    band_blocks = int(band.max())
    q_start = np.where(has, np.minimum(first, num_q - band_blocks), 0)
    q_start = jnp.asarray(q_start.astype(np.int32))

    w_bf16 = jnp.asarray(w_pad, dtype=jnp.bfloat16)   # bf16 halves the W stream
    return w_bf16, q_start, band_blocks, TP, TQ, P_pad, Q_pad, num_p, num_q


# ----------------------------------------------------------------------------
# Pallas kernel: band-restricted tiled matmul
#   out[BC, P_tile] = sum_q rv[BC, q_band] @ W_T[q_band, P_tile]
# Output block index is constant along the inner q axis, so we accumulate
# directly into o_ref (f32) -- no VMEM scratch, no zero fill.
# ----------------------------------------------------------------------------
def _rv2bev_kernel(qstart_ref, rv_ref, w_ref, o_ref, *, tq, rv_resident):
    q_step = pl.program_id(1)

    if rv_resident:
        # Whole rv operand is VMEM-resident; slice the current Q band out of it.
        q0 = pl.multiple_of((qstart_ref[pl.program_id(0)] + q_step) * tq, tq)
        rv_tile = rv_ref[:, pl.ds(q0, tq)]
    else:
        rv_tile = rv_ref[...]

    prod = jnp.dot(rv_tile, w_ref[...], preferred_element_type=jnp.float32)

    @pl.when(q_step == 0)
    def _store_first():
        o_ref[...] = prod

    @pl.when(q_step != 0)
    def _accumulate():
        o_ref[...] += prod


# ----------------------------------------------------------------------------
# Wrapper: layout plumbing only (reshape + pad); all geometry work is cached.
# ----------------------------------------------------------------------------
def rv2bev(rv_feat, rv_size, bev_size, *, tile_p=512, tile_q=512,
           sensor_h=1.73, max_range=50.0,
           fov_phi=(-math.pi, math.pi),
           fov_theta=(-25 * math.pi / 180, 3 * math.pi / 180),
           range_xy=(-50.0, 50.0, -50.0, 50.0)):
    B, C, H_r, W_r = rv_feat.shape
    assert (H_r, W_r) == tuple(rv_size)
    H_b, W_b = bev_size
    P = H_b * W_b
    Q = H_r * W_r
    BC = B * C

    (w_bf16, q_start, band_blocks, TP, TQ, P_pad, Q_pad, num_p, num_q) = \
        _precompute(tuple(rv_size), tuple(bev_size), int(tile_p), int(tile_q),
                    float(sensor_h), float(max_range), tuple(fov_phi),
                    tuple(fov_theta), tuple(range_xy))

    # NCHW -> [BC, Q] is a pure reshape (no transpose), bf16 for the stream,
    # BC padded to 16 (bf16 sublane tile is (16, 128)).
    BC_pad = _round_up(BC, 16)
    rv_flat = rv_feat.reshape(BC, Q).astype(jnp.bfloat16)
    rv_flat = jnp.pad(rv_flat, ((0, BC_pad - BC), (0, Q_pad - Q)))

    # Keep rv fully VMEM-resident (single DMA, constant block index) when it is
    # small; otherwise band-stream it exactly like W.
    rv_resident = (BC_pad * Q_pad * 2) <= (8 * 1024 * 1024)
    if rv_resident:
        rv_spec = pl.BlockSpec((BC_pad, Q_pad), lambda p, q, qs: (0, 0))
        rv_vmem = BC_pad * Q_pad * 2
    else:
        rv_spec = pl.BlockSpec((BC_pad, TQ), lambda p, q, qs: (0, qs[p] + q))
        rv_vmem = 2 * BC_pad * TQ * 2           # double-buffered

    # VMEM budget (bf16 W double-buffered, f32 out double-buffered) with slack;
    # capped at 48 MiB so it is safe on v7x's 64 MiB physical VMEM while still
    # well inside v5e/v6e's 128 MiB.
    w_vmem = 2 * TQ * TP * 2
    out_vmem = 2 * BC_pad * TP * 4
    need = rv_vmem + w_vmem + out_vmem
    vmem_limit = int(min(max(4 * need, 16 * 1024 * 1024), 48 * 1024 * 1024))

    band_q = band_blocks * TQ
    cost = pl.CostEstimate(
        flops=int(2 * BC_pad * band_q * P_pad),
        transcendentals=0,
        bytes_accessed=int(
            2 * band_q * P_pad                                   # W band (bf16)
            + (BC_pad * Q_pad * 2 if rv_resident
               else 2 * num_p * band_q * BC_pad)                 # rv stream
            + 4 * BC_pad * P_pad),                               # output (f32)
    )

    kernel = functools.partial(_rv2bev_kernel, tq=TQ, rv_resident=rv_resident)

    out_flat = pl.pallas_call(
        kernel,
        out_shape=jax.ShapeDtypeStruct((BC_pad, P_pad), jnp.float32),
        grid_spec=pltpu.PrefetchScalarGridSpec(
            num_scalar_prefetch=1,                 # per-P-tile Q-band offsets
            grid=(num_p, band_blocks),             # reduction (band) axis last
            in_specs=[
                rv_spec,                                              # rv [BC, Q]
                pl.BlockSpec((TQ, TP), lambda p, q, qs: (qs[p] + q, p)),  # W_T
            ],
            out_specs=pl.BlockSpec((BC_pad, TP), lambda p, q, qs: (0, p)),
        ),
        compiler_params=pltpu.CompilerParams(
            dimension_semantics=("parallel", "arbitrary"),
            vmem_limit_bytes=vmem_limit),
        cost_estimate=cost,
    )(q_start, rv_flat, w_bf16)

    # [BC, P] -> NCHW [B, C, H_b, W_b]  (reshape only, no transpose)
    out = out_flat[:BC, :P].reshape(B, C, H_b, W_b)
    return out.astype(rv_feat.dtype)


# ----------------------------------------------------------------------------
# Pure-JAX reference (bilinear grid_sample, zeros padding, align_corners=True)
# ----------------------------------------------------------------------------
def rv2bev_ref(rv_feat, rv_size, bev_size, **grid_kwargs):
    B, C, H_r, W_r = rv_feat.shape
    gx, gy = build_grid(rv_size, bev_size, **grid_kwargs)
    x = (gx + 1.0) * 0.5 * (W_r - 1)
    y = (gy + 1.0) * 0.5 * (H_r - 1)
    x0 = np.floor(x).astype(np.int32); x1 = x0 + 1
    y0 = np.floor(y).astype(np.int32); y1 = y0 + 1
    wx1 = x - np.floor(x); wx0 = 1.0 - wx1
    wy1 = y - np.floor(y); wy0 = 1.0 - wy1
    img = rv_feat.astype(jnp.float32)

    def tap(xi, yi, w):
        valid = (xi >= 0) & (xi < W_r) & (yi >= 0) & (yi < H_r)
        xi_c = np.clip(xi, 0, W_r - 1)
        yi_c = np.clip(yi, 0, H_r - 1)
        v = img[:, :, yi_c, xi_c]                       # (B, C, H_b, W_b)
        return v * jnp.asarray(np.where(valid, w, 0.0))[None, None]

    out = (tap(x0, y0, wx0 * wy0) + tap(x1, y0, wx1 * wy0)
           + tap(x0, y1, wx0 * wy1) + tap(x1, y1, wx1 * wy1))
    return out.astype(rv_feat.dtype)


if __name__ == "__main__":
    key = jax.random.PRNGKey(0)
    B, C = 2, 4
    H_r, W_r = 16, 16        # range-view feature map
    H_b, W_b = 16, 16        # BEV output grid

    rv_feat = jax.random.normal(key, (B, C, H_r, W_r), dtype=jnp.float32)

    out = jax.block_until_ready(rv2bev(rv_feat, (H_r, W_r), (H_b, W_b)))
    assert out.shape == (B, C, H_b, W_b), out.shape

    ref = jax.block_until_ready(rv2bev_ref(rv_feat, (H_r, W_r), (H_b, W_b)))
    # W_T / rv are stored as bf16 (f32 accumulation) -> allow bf16-level error.
    max_err = float(jnp.max(jnp.abs(out - ref)))
    assert max_err < 5e-2, max_err

    print("KERNEL_OK")
</pallas_src>

<mosaic_0001>
module attributes {stable_mosaic.version = 11 : i64} {
  func.func @_rv2bev_kernel(%arg0: i32, %arg1: i32, %arg2: memref<1xi32, #tpu.memory_space<smem>>, %arg3: memref<16x256xbf16, #tpu.memory_space<vmem>>, %arg4: memref<256x256xbf16, #tpu.memory_space<vmem>>, %arg5: memref<16x256xf32, #tpu.memory_space<vmem>>) attributes {dimension_semantics = [#tpu.dimension_semantics<parallel>, #tpu.dimension_semantics<arbitrary>], iteration_bounds = array<i64: 1, 1>, scalar_prefetch = 1 : i64, scratch_operands = 0 : i64, tpu.core_type = #tpu.core_type<tc>, window_params = [{pipeline_mode = #tpu.pipeline_mode<synchronous>, transform_indices = @transform_0, window_bounds = array<i64: 16, 256>}, {transform_indices = @transform_1, window_bounds = array<i64: 256, 256>}, {transform_indices = @transform_2, window_bounds = array<i64: 16, 256>}]} {
    %0 = arith.index_cast %arg0 : i32 to index
    %1 = memref.load %arg2[%0] : memref<1xi32, #tpu.memory_space<smem>>
    %2 = arith.addi %1, %arg1 : i32
    %c256_i32 = arith.constant 256 : i32
    %3 = arith.muli %2, %c256_i32 : i32
    %4 = tpu.assume_multiple %3, 256 : i32
    %c0 = arith.constant 0 : index
    %5 = arith.index_cast %4 : i32 to index
    %6 = vector.load %arg3[%c0, %5] : memref<16x256xbf16, #tpu.memory_space<vmem>>, vector<16x256xbf16>
    %c0_0 = arith.constant 0 : index
    %c0_1 = arith.constant 0 : index
    %7 = vector.load %arg4[%c0_0, %c0_1] : memref<256x256xbf16, #tpu.memory_space<vmem>>, vector<256x256xbf16>
    %cst = arith.constant dense<0.000000e+00> : vector<16x256xf32>
    %8 = tpu.matmul %6, %7, %cst {dimension_numbers = #tpu.dot_dimension_numbers<[1], [0], [0], [1], [0, 0, 1, 1], [], []>} : vector<16x256xbf16>, vector<256x256xbf16>, vector<16x256xf32> -> vector<16x256xf32>
    %c0_i32 = arith.constant 0 : i32
    %9 = arith.cmpi eq, %arg1, %c0_i32 : i32
    %10 = arith.extui %9 : i1 to i32
    %c0_i32_2 = arith.constant 0 : i32
    %11 = arith.cmpi ne, %10, %c0_i32_2 : i32
    scf.if %11 {
      %c0_5 = arith.constant 0 : index
      %c0_6 = arith.constant 0 : index
      %15 = vector.load %arg5[%c0_5, %c0_6] : memref<16x256xf32, #tpu.memory_space<vmem>>, vector<16x256xf32>
      tpu.vector_store %arg5[%c0_5, %c0_6], %8 {strides = array<i32>} : memref<16x256xf32, #tpu.memory_space<vmem>>, vector<16x256xf32>,
    } else {
    }
    %c0_i32_3 = arith.constant 0 : i32
    %12 = arith.cmpi ne, %arg1, %c0_i32_3 : i32
    %13 = arith.extui %12 : i1 to i32
    %c0_i32_4 = arith.constant 0 : i32
    %14 = arith.cmpi ne, %13, %c0_i32_4 : i32
    scf.if %14 {
      %c0_5 = arith.constant 0 : index
      %c0_6 = arith.constant 0 : index
      %15 = vector.load %arg5[%c0_5, %c0_6] : memref<16x256xf32, #tpu.memory_space<vmem>>, vector<16x256xf32>
      %16 = arith.addf %15, %8 : vector<16x256xf32>
      %c0_7 = arith.constant 0 : index
      %c0_8 = arith.constant 0 : index
      %17 = vector.load %arg5[%c0_7, %c0_8] : memref<16x256xf32, #tpu.memory_space<vmem>>, vector<16x256xf32>
      tpu.vector_store %arg5[%c0_7, %c0_8], %16 {strides = array<i32>} : memref<16x256xf32, #tpu.memory_space<vmem>>, vector<16x256xf32>,
    } else {
    }
    return
  }
  func.func @transform_0(%arg0: i32, %arg1: i32, %arg2: memref<1xi32, #tpu.memory_space<smem>>) -> (i32, i32) {
    %c0_i32 = arith.constant 0 : i32
    %c0_i32_0 = arith.constant 0 : i32
    %c0_i32_1 = arith.constant 0 : i32
    return %c0_i32, %c0_i32_0 : i32, i32
  }
  func.func @transform_1(%arg0: i32, %arg1: i32, %arg2: memref<1xi32, #tpu.memory_space<smem>>) -> (i32, i32) {
    %0 = arith.index_cast %arg0 : i32 to index
    %1 = memref.load %arg2[%0] : memref<1xi32, #tpu.memory_space<smem>>
    %2 = arith.addi %1, %arg1 : i32
    %c0_i32 = arith.constant 0 : i32
    return %2, %arg0 : i32, i32
  }
  func.func @transform_2(%arg0: i32, %arg1: i32, %arg2: memref<1xi32, #tpu.memory_space<smem>>) -> (i32, i32) {
    %c0_i32 = arith.constant 0 : i32
    %c0_i32_0 = arith.constant 0 : i32
    return %c0_i32, %arg0 : i32, i32
  }
}

</mosaic_0001>

<llo_original>
// kernel: tpu_custom_call.1
$region0: #{tpu_custom_call.1}
  #allocation0 [shape = 'u32[]', space=smem, size = 0x4, offset = 0x4, fixed_abs, tag = 'smem constant byte address 0x4 - core index']
  #allocation1 [shape = 'u32[144,128]{1,0:T(1,128)}', space=vmem, size = 0x12000, scoped, tag = 'internal scratch']
  #allocation2 [shape = 's32[1]{0}', space=sflag, size = 0x4, scoped, tag = 'scoped memory for tpu_custom_call.1']
  #allocation3 [shape = 's32[1]{0:T(128)S(6)}', space=smem, size = 0x200, scoped, tag = 'prefetched SMEM operand 0']
  %s0 = inlined_call_operand.<no memory space> [shape: s32[1], index: 0, kind: input, shape index: {}]
  %s1 = inlined_call_operand.hbm [shape: bf16[16,256], index: 1, kind: input, shape index: {}]
  %s2 = inlined_call_operand.hbm [shape: bf16[256,256], index: 2, kind: input, shape index: {}]
  %s3 = inlined_call_operand.hbm [shape: f32[16,256], index: 3, kind: output, shape index: {}]
  %s4 = sld [smem:[#allocation0]]
  $region34: #{tpu_custom_call.1} parent=0
    _
  %s6 = ssub.s32 1, %s4
  %s7 = scalar_select 0, %s6, %s4
  %8 = sst [smem:[#allocation3]] %s0
  $region1: #{tpu_custom_call.1} parent=0
    #allocation4 [shape = 'u8[8192]{0}', space=vmem, size = 0x2000, scoped, tag = 'input window, operand 1, single buffered']
    #allocation5 [shape = 's32[1]{0}', space=sflag, size = 0x4, scoped, tag = 'scoped memory for tpu_custom_call.1']
    #allocation6 [shape = 's32[1]{0}', space=sflag, size = 0x4, scoped, tag = 'scoped memory for tpu_custom_call.1']
    #allocation7 [shape = 'u8[131072]{0}', space=vmem, size = 0x20000, scoped, tag = 'input window, operand 2, single buffered']
    #allocation8 [shape = 's32[1]{0}', space=sflag, size = 0x4, scoped, tag = 'scoped memory for tpu_custom_call.1']
    #allocation9 [shape = 'u8[16384]{0}', space=vmem, size = 0x4000, scoped, tag = 'output window, operand 0, single buffered']
    %9 = vsyncpa [#allocation5], 0
    %10 = vsyncpa [#allocation8], 0
    %11 = vsyncpa [#allocation6], 0
    // Predicated region
    $region2: #{tpu_custom_call.1} parent=1 // pred_check
      _
    $region3: #{tpu_custom_call.1} parent=1 // pred_check_branch
      %13 = sbr.rel (0) target = $region5
    $region4: #{tpu_custom_call.1} parent=1 // pred_region
      %s15 = ssub.s32 256, 256
      %16 = vsyncadd [#allocation5], %s15
      %s17 = sshll.u32 [#allocation4], 4
      %s18 = int_to_ptr.vmem [resolvable:$true] %s17
      %23 = dma.hbm_to_vmem [thread:$0]  %s1, 256, %s18, [#allocation5], 128, 128, 8
    $region5: #{tpu_custom_call.1} parent=1 // pred_fallthru
      _
    // Predicated region
    $region6: #{tpu_custom_call.1} parent=1 // pred_check
      _
    $region7: #{tpu_custom_call.1} parent=1 // pred_check_branch
      %25 = sbr.rel (0) target = $region9
    $region8: #{tpu_custom_call.1} parent=1 // pred_region
      %s26 = sld [smem:[#allocation3]]
      %s27 = sadd.s32 %s26, 0
      %s28 = smul.u32 32, %s27
      %s30 = ssub.s32 4096, 4096
      %31 = vsyncadd [#allocation8], %s30
      %s32 = smul.addr %s28, 2
      %s33 = smul.addr %s32, 64
      %s34 = scalar_lea.hbm %s2, %s33
      %s35 = sshll.u32 [#allocation7], 4
      %s36 = int_to_ptr.vmem [resolvable:$true] %s35
      %41 = dma.hbm_to_vmem [thread:$0]  %s34, 4096, %s36, [#allocation8], 128, 128, 8
    $region9: #{tpu_custom_call.1} parent=1 // pred_fallthru
      _
    // Predicated region
    $region10: #{tpu_custom_call.1} parent=1 // pred_check
      _
    $region11: #{tpu_custom_call.1} parent=1 // pred_check_branch
      %43 = sbr.rel (0) target = $region13
    $region12: #{tpu_custom_call.1} parent=1 // pred_region
      %44 = dma.done [#allocation5], 256
    $region13: #{tpu_custom_call.1} parent=1 // pred_fallthru
      _
    // Predicated region
    $region14: #{tpu_custom_call.1} parent=1 // pred_check
      _
    $region15: #{tpu_custom_call.1} parent=1 // pred_check_branch
      %46 = sbr.rel (0) target = $region17
    $region16: #{tpu_custom_call.1} parent=1 // pred_region
      %47 = dma.done [#allocation8], 4096
    $region17: #{tpu_custom_call.1} parent=1 // pred_fallthru
      _
    %s48 = sld [smem:[#allocation3]]
    %s49 = sadd.s32 %s48, 0
    %s50 = smul.u32 32, %s49
    %s51 = sld [smem:[#allocation3]]
    %s52 = sadd.s32 %s51, 0
    %s53 = smul.u32 %s52, 256
    %s54 = sshra.s32 %s53, 7
    %s55 = sand.u32 %s53, 127
    %s56 = smul.addr %s54, 4
    %s57 = scalar_lea.vmem [#allocation4], %s56
    %v58 = vld [vmem:[%s57] sm:$0xff]
    %v59 = vld [vmem:[%s57 + $0x8] sm:$0xff]
    %v60 = vld [vmem:[#allocation7] sm:$0xff]
    %v61 = vld [vmem:[#allocation7 + $0x8] sm:$0xff]
    %v62 = vld [vmem:[#allocation7 + $0x10] sm:$0xff]
    %v63 = vld [vmem:[#allocation7 + $0x18] sm:$0xff]
    %v64 = vld [vmem:[#allocation7 + $0x20] sm:$0xff]
    %v65 = vld [vmem:[#allocation7 + $0x28] sm:$0xff]
    %v66 = vld [vmem:[#allocation7 + $0x30] sm:$0xff]
    %v67 = vld [vmem:[#allocation7 + $0x38] sm:$0xff]
    %v68 = vld [vmem:[#allocation7 + $0x40] sm:$0xff]
    %v69 = vld [vmem:[#allocation7 + $0x48] sm:$0xff]
    %v70 = vld [vmem:[#allocation7 + $0x50] sm:$0xff]
    %v71 = vld [vmem:[#allocation7 + $0x58] sm:$0xff]
    %v72 = vld [vmem:[#allocation7 + $0x60] sm:$0xff]
    %v73 = vld [vmem:[#allocation7 + $0x68] sm:$0xff]
    %v74 = vld [vmem:[#allocation7 + $0x70] sm:$0xff]
    %v75 = vld [vmem:[#allocation7 + $0x78] sm:$0xff]
    %v76 = vld [vmem:[#allocation7 + $0x80] sm:$0xff]
    %v77 = vld [vmem:[#allocation7 + $0x88] sm:$0xff]
    %v78 = vld [vmem:[#allocation7 + $0x90] sm:$0xff]
    %v79 = vld [vmem:[#allocation7 + $0x98] sm:$0xff]
    %v80 = vld [vmem:[#allocation7 + $0xa0] sm:$0xff]
    %v81 = vld [vmem:[#allocation7 + $0xa8] sm:$0xff]
    %v82 = vld [vmem:[#allocation7 + $0xb0] sm:$0xff]
    %v83 = vld [vmem:[#allocation7 + $0xb8] sm:$0xff]
    %v84 = vld [vmem:[#allocation7 + $0xc0] sm:$0xff]
    %v85 = vld [vmem:[#allocation7 + $0xc8] sm:$0xff]
    %v86 = vld [vmem:[#allocation7 + $0xd0] sm:$0xff]
    %v87 = vld [vmem:[#allocation7 + $0xd8] sm:$0xff]
    %v88 = vld [vmem:[#allocation7 + $0xe0] sm:$0xff]
    %v89 = vld [vmem:[#allocation7 + $0xe8] sm:$0xff]
    %v90 = vld [vmem:[#allocation7 + $0xf0] sm:$0xff]
    %v91 = vld [vmem:[#allocation7 + $0xf8] sm:$0xff]
    %v94 = vunpack.c.l.b16 %v58
    %v95 = vunpack.c.h.b16 %v58
    %v96 = vunpack.c.l.b16 %v59
    %v97 = vunpack.c.h.b16 %v59
    %v98 = vpack.c.b16 %v96, %v94
    %v99 = vpack.c.b16 %v97, %v95
    %v134 = vunpack.c.l.b16 %v60
    %v135 = vunpack.c.h.b16 %v60
    %v136 = vunpack.c.l.b16 %v61
    %v137 = vunpack.c.h.b16 %v61
    %v138 = vunpack.c.l.b16 %v62
    %v139 = vunpack.c.h.b16 %v62
    %v140 = vunpack.c.l.b16 %v63
    %v141 = vunpack.c.h.b16 %v63
    %v142 = vunpack.c.l.b16 %v64
    %v143 = vunpack.c.h.b16 %v64
    %v144 = vunpack.c.l.b16 %v65
    %v145 = vunpack.c.h.b16 %v65
    %v146 = vunpack.c.l.b16 %v66
    %v147 = vunpack.c.h.b16 %v66
    %v148 = vunpack.c.l.b16 %v67
    %v149 = vunpack.c.h.b16 %v67
    %v150 = vunpack.c.l.b16 %v68
    %v151 = vunpack.c.h.b16 %v68
    %v152 = vunpack.c.l.b16 %v69
    %v153 = vunpack.c.h.b16 %v69
    %v154 = vunpack.c.l.b16 %v70
    %v155 = vunpack.c.h.b16 %v70
    %v156 = vunpack.c.l.b16 %v71
    %v157 = vunpack.c.h.b16 %v71
    %v158 = vunpack.c.l.b16 %v72
    %v159 = vunpack.c.h.b16 %v72
    %v160 = vunpack.c.l.b16 %v73
    %v161 = vunpack.c.h.b16 %v73
    %v162 = vunpack.c.l.b16 %v74
    %v163 = vunpack.c.h.b16 %v74
    %v164 = vunpack.c.l.b16 %v75
    %v165 = vunpack.c.h.b16 %v75
    %v166 = vunpack.c.l.b16 %v76
    %v167 = vunpack.c.h.b16 %v76
    %v168 = vunpack.c.l.b16 %v77
    %v169 = vunpack.c.h.b16 %v77
    %v170 = vunpack.c.l.b16 %v78
    %v171 = vunpack.c.h.b16 %v78
    %v172 = vunpack.c.l.b16 %v79
    %v173 = vunpack.c.h.b16 %v79
    %v174 = vunpack.c.l.b16 %v80
    %v175 = vunpack.c.h.b16 %v80
    %v176 = vunpack.c.l.b16 %v81
    %v177 = vunpack.c.h.b16 %v81
    %v178 = vunpack.c.l.b16 %v82
    %v179 = vunpack.c.h.b16 %v82
    %v180 = vunpack.c.l.b16 %v83
    %v181 = vunpack.c.h.b16 %v83
    %v182 = vunpack.c.l.b16 %v84
    %v183 = vunpack.c.h.b16 %v84
    %v184 = vunpack.c.l.b16 %v85
    %v185 = vunpack.c.h.b16 %v85
    %v186 = vunpack.c.l.b16 %v86
    %v187 = vunpack.c.h.b16 %v86
    %v188 = vunpack.c.l.b16 %v87
    %v189 = vunpack.c.h.b16 %v87
    %v190 = vunpack.c.l.b16 %v88
    %v191 = vunpack.c.h.b16 %v88
    %v192 = vunpack.c.l.b16 %v89
    %v193 = vunpack.c.h.b16 %v89
    %v194 = vunpack.c.l.b16 %v90
    %v195 = vunpack.c.h.b16 %v90
    %v196 = vunpack.c.l.b16 %v91
    %v197 = vunpack.c.h.b16 %v91
    %v198 = vpack.c.b16 %v136, %v134
    %v199 = vpack.c.b16 %v137, %v135
    %v200 = vpack.c.b16 %v140, %v138
    %v201 = vpack.c.b16 %v141, %v139
    %v202 = vpack.c.b16 %v144, %v142
    %v203 = vpack.c.b16 %v145, %v143
    %v204 = vpack.c.b16 %v148, %v146
    %v205 = vpack.c.b16 %v149, %v147
    %v206 = vpack.c.b16 %v152, %v150
    %v207 = vpack.c.b16 %v153, %v151
    %v208 = vpack.c.b16 %v156, %v154
    %v209 = vpack.c.b16 %v157, %v155
    %v210 = vpack.c.b16 %v160, %v158
    %v211 = vpack.c.b16 %v161, %v159
    %v212 = vpack.c.b16 %v164, %v162
    %v213 = vpack.c.b16 %v165, %v163
    %v214 = vpack.c.b16 %v168, %v166
    %v215 = vpack.c.b16 %v169, %v167
    %v216 = vpack.c.b16 %v172, %v170
    %v217 = vpack.c.b16 %v173, %v171
    %v218 = vpack.c.b16 %v176, %v174
    %v219 = vpack.c.b16 %v177, %v175
    %v220 = vpack.c.b16 %v180, %v178
    %v221 = vpack.c.b16 %v181, %v179
    %v222 = vpack.c.b16 %v184, %v182
    %v223 = vpack.c.b16 %v185, %v183
    %v224 = vpack.c.b16 %v188, %v186
    %v225 = vpack.c.b16 %v189, %v187
    %v226 = vpack.c.b16 %v192, %v190
    %v227 = vpack.c.b16 %v193, %v191
    %v228 = vpack.c.b16 %v196, %v194
    %v229 = vpack.c.b16 %v197, %v195
    %262 = vmatprep.subr.bf16.mxu0 %v199
    %263 = vmatpush1.bf16.msra.mxu0 %v198
    %264 = vmatprep.subr.bf16.mxu0 %v201
    %265 = vmatpush1.bf16.msra.mxu0 %v200
    %266 = vmatprep.subr.bf16.mxu0 %v203
    %267 = vmatpush1.bf16.msra.mxu0 %v202
    %268 = vmatprep.subr.bf16.mxu0 %v205
    %269 = vmatpush1.bf16.msra.mxu0 %v204
    %270 = vmatprep.subr.bf16.mxu0 %v207
    %271 = vmatpush1.bf16.msra.mxu0 %v206
    %272 = vmatprep.subr.bf16.mxu0 %v209
    %273 = vmatpush1.bf16.msra.mxu0 %v208
    %274 = vmatprep.subr.bf16.mxu0 %v211
    %275 = vmatpush1.bf16.msra.mxu0 %v210
    %276 = vmatprep.subr.bf16.mxu0 %v213
    %277 = vmatpush1.bf16.msra.mxu0 %v212
    %278 = vmatprep.subr.bf16.mxu0 %v215
    %279 = vmatpush1.bf16.msra.mxu0 %v214
    %280 = vmatprep.subr.bf16.mxu0 %v217
    %281 = vmatpush1.bf16.msra.mxu0 %v216
    %282 = vmatprep.subr.bf16.mxu0 %v219
    %283 = vmatpush1.bf16.msra.mxu0 %v218
    %284 = vmatprep.subr.bf16.mxu0 %v221
    %285 = vmatpush1.bf16.msra.mxu0 %v220
    %286 = vmatprep.subr.bf16.mxu0 %v223
    %287 = vmatpush1.bf16.msra.mxu0 %v222
    %288 = vmatprep.subr.bf16.mxu0 %v225
    %289 = vmatpush1.bf16.msra.mxu0 %v224
    %290 = vmatprep.subr.bf16.mxu0 %v227
    %291 = vmatpush1.bf16.msra.mxu0 %v226
    %292 = vmatprep.subr.bf16.mxu0 %v229
    %293 = vmatpush1.bf16.msra.mxu0 %v228
    %294 = vmatprep.mubr.bf16.mxu0 %v99
    %295 = vmatmul.mubr.bf16.gmra.mrb[0].mxu0 %v98
    %v296 = vpop.f32.mrb[0].mxu0
    %v297 = vadd.f32 0.0, %v296
    %v298 = vpop.f32.mrb[0].mxu0
    %v299 = vadd.f32 0.0, %v298
    %v300 = vpop.f32.mrb[0].mxu0
    %v301 = vadd.f32 0.0, %v300
    %v302 = vpop.f32.mrb[0].mxu0
    %v303 = vadd.f32 0.0, %v302
    %304 = vdwg.mxu0
    %p305 = scmp.eq.s32.totalorder 0, 0
    // Predicated region
    $region18: #{tpu_custom_call.1} parent=1 // pred_check
      %p306 = pneg %p305
    $region19: #{tpu_custom_call.1} parent=1 // pred_check_branch
      %308 = sbr.rel (%p306) target = $region21
    $region20: #{tpu_custom_call.1} parent=1 // pred_region
      %309 = vst [vmem:[#allocation9] sm:$0xff] %v297
      %310 = vst [vmem:[#allocation9 + $0x8] sm:$0xff] %v299
      %311 = vst [vmem:[#allocation9 + $0x10] sm:$0xff] %v301
      %312 = vst [vmem:[#allocation9 + $0x18] sm:$0xff] %v303
    $region21: #{tpu_custom_call.1} parent=1 // pred_fallthru
      _
    %p313 = scmp.ne.s32.totalorder 0, 0
    // Predicated region
    $region22: #{tpu_custom_call.1} parent=1 // pred_check
      %p314 = pneg %p313
    $region23: #{tpu_custom_call.1} parent=1 // pred_check_branch
      %316 = sbr.rel (%p314) target = $region25
    $region24: #{tpu_custom_call.1} parent=1 // pred_region
      %v317 = vld [vmem:[#allocation9] sm:$0xff]
      %v318 = vld [vmem:[#allocation9 + $0x8] sm:$0xff]
      %v319 = vld [vmem:[#allocation9 + $0x10] sm:$0xff]
      %v320 = vld [vmem:[#allocation9 + $0x18] sm:$0xff]
      %v321 = vadd.f32 %v317, %v297
      %v322 = vadd.f32 %v318, %v299
      %v323 = vadd.f32 %v319, %v301
      %v324 = vadd.f32 %v320, %v303
      %325 = vst [vmem:[#allocation9] sm:$0xff] %v321
      %326 = vst [vmem:[#allocation9 + $0x8] sm:$0xff] %v322
      %327 = vst [vmem:[#allocation9 + $0x10] sm:$0xff] %v323
      %328 = vst [vmem:[#allocation9 + $0x18] sm:$0xff] %v324
    $region25: #{tpu_custom_call.1} parent=1 // pred_fallthru
      _
    // Predicated region
    $region26: #{tpu_custom_call.1} parent=1 // pred_check
      _
    $region27: #{tpu_custom_call.1} parent=1 // pred_check_branch
      %330 = sbr.rel (0) target = $region29
    $region28: #{tpu_custom_call.1} parent=1 // pred_region
      %s332 = ssub.s32 512, 512
      %333 = vsyncadd [#allocation6], %s332
      %s334 = sshll.u32 [#allocation9], 4
      %s335 = int_to_ptr.vmem [resolvable:$true] %s334
      %340 = dma.vmem_to_hbm [thread:$0]  %s335, 512, %s3, [#allocation6], 256, 256, 16
    $region29: #{tpu_custom_call.1} parent=1 // pred_fallthru
      _
    // Predicated region
    $region30: #{tpu_custom_call.1} parent=1 // pred_check
      _
    $region31: #{tpu_custom_call.1} parent=1 // pred_check_branch
      %342 = sbr.rel (0) target = $region33
    $region32: #{tpu_custom_call.1} parent=1 // pred_region
      %343 = dma.done [#allocation6], 512
    $region33: #{tpu_custom_call.1} parent=1 // pred_fallthru
      _
    %344 = vsyncpa [#allocation5], 1
    %345 = vsyncpa [#allocation8], 1
    %346 = vsyncpa [#allocation6], 1

</llo_original>
